<compile_context>
chip_gen: v7x
topology: tpu7x:2x2x1
jax: 0.10.0
libtpu: 0.0.40
codegen_flags: <defaults>
</compile_context>

<pallas_src>
import math
from functools import partial

import jax
import jax.numpy as jnp
from jax import lax
from jax.experimental import pallas as pl
from jax.experimental.pallas import tpu as pltpu


def _prenorm_layernorm_kernel(x_ref, g_ref, o_ref, *, eps, inv_c):
    # x_ref: (1, C, TS) x.dtype   g_ref: (1, C, 1) f32   o_ref: (1, C, TS) x.dtype
    xf = x_ref[...].astype(jnp.float32)                 # up-cast in VMEM only
    s = jnp.sum(xf, axis=1, keepdims=True)              # (1, 1, TS)
    ss = jnp.sum(xf * xf, axis=1, keepdims=True)        # (1, 1, TS)
    mean = s * inv_c
    var = jnp.maximum(ss * inv_c - mean * mean, 0.0)    # clamp cancellation noise
    inv = lax.rsqrt(var + eps)                          # EUP rsqrt
    # Single lane-dense store of the full (C, TS) tile; no concat / partial writes.
    o_ref[...] = ((xf - mean) * (inv * g_ref[...])).astype(o_ref.dtype)


def _cdiv(a, b):
    return -(-a // b)


def _pick_spatial_tile(S, C, in_bytes, out_bytes, B,
                       budget_bytes=16 << 20, cap=4096, min_grid_steps=4):
    """Largest 128-multiple lane tile that fits a per-call VMEM budget.

    Budget models the double-buffered in+out tiles plus ~2 f32 intermediates,
    so the choice is safe on v7x (64 MiB VMEM / 32 MiB scoped default) while
    still using big tiles on v5e/v6e. Never returns a full-extent-S block.
    """
    s128 = _cdiv(S, 128) * 128                      # lane extent rounded to vreg width
    per_elem = 2 * (in_bytes + out_bytes) + 8       # 2x(in+out) buffers + f32 temps
    ts = budget_bytes // max(C * per_elem, 1)
    ts = min(ts, cap, s128)
    ts = max(128, (ts // 128) * 128)
    # Keep >= min_grid_steps total grid steps so both TensorCores on a v7x chip
    # get work; only shrink for small problems and never below 256 lanes.
    while B * _cdiv(S, ts) < min_grid_steps and ts >= 512:
        ts = max(256, (ts // 2 // 128) * 128)
    return ts


def pre_norm(x, gamma, *, eps=1e-5, fn=None, fn_kwargs=None):
    """Pallas implementation of PreNorm(dim, fn).forward(x, **kwargs).

    x:     (B, C, F, H, W) array (any float dtype; kernel computes in f32).
    gamma: (1, C, 1, 1, 1) LayerNorm scale parameter.
    fn:    optional callable applied to the normalized tensor (identity if None).
    """
    # TODO(synk): PreNorm wraps an arbitrary fn(x, **kwargs); only the LayerNorm
    # is lowered to Pallas here — fn is applied afterwards as a plain JAX callable.
    B, C = x.shape[0], x.shape[1]
    S = int(math.prod(x.shape[2:]))

    x3 = x.reshape(B, C, S)                               # keep native dtype: no HBM up-cast pass
    g3 = jnp.asarray(gamma, jnp.float32).reshape(1, C, 1)  # tiny, stays f32

    in_bytes = x.dtype.itemsize
    out_bytes = in_bytes
    TS = _pick_spatial_tile(S, C, in_bytes, out_bytes, B)
    n_s = _cdiv(S, TS)                                     # partial last tile masked by Pallas

    cost = pl.CostEstimate(
        flops=7 * B * C * S,
        transcendentals=B * S,                             # one rsqrt per spatial position
        bytes_accessed=B * C * S * (in_bytes + out_bytes) + C * 4,
    )

    y3 = pl.pallas_call(
        partial(_prenorm_layernorm_kernel, eps=float(eps), inv_c=1.0 / C),
        out_shape=jax.ShapeDtypeStruct((B, C, S), x.dtype),
        grid=(B, n_s),
        in_specs=[
            pl.BlockSpec((1, C, TS), lambda b, s: (b, 0, s)),
            pl.BlockSpec((1, C, 1), lambda b, s: (0, 0, 0)),
        ],
        out_specs=pl.BlockSpec((1, C, TS), lambda b, s: (b, 0, s)),
        compiler_params=pltpu.CompilerParams(
            dimension_semantics=("parallel", "parallel"),
            vmem_limit_bytes=32 * 1024 * 1024,
        ),
        cost_estimate=cost,
    )(x3, g3)

    y = y3.reshape(x.shape)
    if fn is not None:
        y = fn(y, **(fn_kwargs or {}))
    return y


def _reference(x, gamma, eps=1e-5):
    xf = x.astype(jnp.float32)
    mean = jnp.mean(xf, axis=1, keepdims=True)
    var = jnp.mean((xf - mean) ** 2, axis=1, keepdims=True)
    return (xf - mean) / jnp.sqrt(var + eps) * jnp.asarray(gamma, jnp.float32)


if __name__ == "__main__":
    key = jax.random.PRNGKey(0)
    k1, k2, k3 = jax.random.split(key, 3)

    # Small shapes consistent with the module: (B, C, frames, H, W)
    B, C, F_, H, W = 2, 4, 4, 8, 16
    x = jax.random.normal(k1, (B, C, F_, H, W), dtype=jnp.float32)
    gamma = 1.0 + 0.1 * jax.random.normal(k2, (1, C, 1, 1, 1), dtype=jnp.float32)

    # f32 path (fn = identity; PreNorm's wrapped module is arbitrary).
    out = jax.block_until_ready(pre_norm(x, gamma, eps=1e-5, fn=None))
    ref = _reference(x, gamma, eps=1e-5)
    assert out.shape == x.shape and out.dtype == x.dtype, (out.shape, out.dtype)
    assert jnp.allclose(out, ref, atol=1e-4, rtol=1e-4), "f32 mismatch vs reference"

    # bf16 I/O path: kernel reads/writes bf16, computes in f32 internally.
    xb = x.astype(jnp.bfloat16)
    outb = jax.block_until_ready(pre_norm(xb, gamma, eps=1e-5, fn=None))
    refb = _reference(xb, gamma, eps=1e-5)
    assert outb.dtype == jnp.bfloat16
    assert jnp.allclose(outb.astype(jnp.float32), refb, atol=3e-2, rtol=3e-2), \
        "bf16 mismatch vs reference"

    # Irregular spatial extent (S = 70, not a multiple of 128): partial last
    # tile is masked by Pallas — no full-extent fallback, no pad copy in HBM.
    xi = jax.random.normal(k3, (1, 3, 2, 5, 7), dtype=jnp.float32)
    gi = jnp.ones((1, 3, 1, 1, 1), dtype=jnp.float32)
    outi = jax.block_until_ready(pre_norm(xi, gi, eps=1e-5, fn=None))
    refi = _reference(xi, gi, eps=1e-5)
    assert jnp.allclose(outi, refi, atol=1e-4, rtol=1e-4), "irregular-S mismatch"

    print("KERNEL_OK")
</pallas_src>

<mosaic_0001>
module attributes {stable_mosaic.version = 11 : i64} {
  func.func @_prenorm_layernorm_kernel(%arg0: i32, %arg1: i32, %arg2: memref<1x4x256xf32, #tpu.memory_space<vmem>>, %arg3: memref<1x4x1xf32, #tpu.memory_space<vmem>>, %arg4: memref<1x4x256xf32, #tpu.memory_space<vmem>>) attributes {dimension_semantics = [#tpu.dimension_semantics<parallel>, #tpu.dimension_semantics<parallel>], iteration_bounds = array<i64: 2, 2>, scalar_prefetch = 0 : i64, scratch_operands = 0 : i64, tpu.core_type = #tpu.core_type<tc>, window_params = [{transform_indices = @transform_0, window_bounds = array<i64: 1, 4, 256>}, {pipeline_mode = #tpu.pipeline_mode<synchronous>, transform_indices = @transform_1, window_bounds = array<i64: 1, 4, 1>}, {transform_indices = @transform_2, window_bounds = array<i64: 1, 4, 256>}]} {
    %c0 = arith.constant 0 : index
    %c0_0 = arith.constant 0 : index
    %c0_1 = arith.constant 0 : index
    %0 = vector.load %arg2[%c0, %c0_0, %c0_1] : memref<1x4x256xf32, #tpu.memory_space<vmem>>, vector<1x4x256xf32>
    %cst = arith.constant dense<0.000000e+00> : vector<1x256xf32>
    %1 = vector.multi_reduction <add>, %0, %cst [1] : vector<1x4x256xf32> to vector<1x256xf32>
    %2 = vector.shape_cast %1 : vector<1x256xf32> to vector<1x1x256xf32>
    %3 = arith.mulf %0, %0 : vector<1x4x256xf32>
    %cst_2 = arith.constant dense<0.000000e+00> : vector<1x256xf32>
    %4 = vector.multi_reduction <add>, %3, %cst_2 [1] : vector<1x4x256xf32> to vector<1x256xf32>
    %5 = vector.shape_cast %4 : vector<1x256xf32> to vector<1x1x256xf32>
    %cst_3 = arith.constant 2.500000e-01 : f32
    %6 = vector.broadcast %cst_3 : f32 to vector<1x1x256xf32>
    %7 = arith.mulf %2, %6 : vector<1x1x256xf32>
    %cst_4 = arith.constant 2.500000e-01 : f32
    %8 = vector.broadcast %cst_4 : f32 to vector<1x1x256xf32>
    %9 = arith.mulf %5, %8 : vector<1x1x256xf32>
    %10 = arith.mulf %7, %7 : vector<1x1x256xf32>
    %11 = arith.subf %9, %10 : vector<1x1x256xf32>
    %cst_5 = arith.constant 0.000000e+00 : f32
    %12 = vector.broadcast %cst_5 : f32 to vector<1x1x256xf32>
    %13 = arith.maximumf %11, %12 : vector<1x1x256xf32>
    %cst_6 = arith.constant 9.99999974E-6 : f32
    %14 = vector.broadcast %cst_6 : f32 to vector<1x1x256xf32>
    %15 = arith.addf %13, %14 : vector<1x1x256xf32>
    %16 = math.rsqrt %15 : vector<1x1x256xf32>
    %17 = vector.broadcast %7 : vector<1x1x256xf32> to vector<1x4x256xf32>
    %18 = arith.subf %0, %17 : vector<1x4x256xf32>
    %c0_7 = arith.constant 0 : index
    %c0_8 = arith.constant 0 : index
    %c0_9 = arith.constant 0 : index
    %19 = vector.load %arg3[%c0_7, %c0_8, %c0_9] : memref<1x4x1xf32, #tpu.memory_space<vmem>>, vector<1x4x1xf32>
    %20 = vector.broadcast %16 : vector<1x1x256xf32> to vector<1x4x256xf32>
    %21 = vector.broadcast %19 : vector<1x4x1xf32> to vector<1x4x256xf32>
    %22 = arith.mulf %20, %21 : vector<1x4x256xf32>
    %23 = arith.mulf %18, %22 : vector<1x4x256xf32>
    %c0_10 = arith.constant 0 : index
    %c0_11 = arith.constant 0 : index
    %c0_12 = arith.constant 0 : index
    %24 = vector.load %arg4[%c0_10, %c0_11, %c0_12] : memref<1x4x256xf32, #tpu.memory_space<vmem>>, vector<1x4x256xf32>
    tpu.vector_store %arg4[%c0_10, %c0_11, %c0_12], %23 {strides = array<i32>} : memref<1x4x256xf32, #tpu.memory_space<vmem>>, vector<1x4x256xf32>,
    return
  }
  func.func @transform_0(%arg0: i32, %arg1: i32) -> (i32, i32, i32) {
    %c0_i32 = arith.constant 0 : i32
    %c0_i32_0 = arith.constant 0 : i32
    return %arg0, %c0_i32, %arg1 : i32, i32, i32
  }
  func.func @transform_1(%arg0: i32, %arg1: i32) -> (i32, i32, i32) {
    %c0_i32 = arith.constant 0 : i32
    %c0_i32_0 = arith.constant 0 : i32
    %c0_i32_1 = arith.constant 0 : i32
    %c0_i32_2 = arith.constant 0 : i32
    return %c0_i32, %c0_i32_0, %c0_i32_1 : i32, i32, i32
  }
  func.func @transform_2(%arg0: i32, %arg1: i32) -> (i32, i32, i32) {
    %c0_i32 = arith.constant 0 : i32
    %c0_i32_0 = arith.constant 0 : i32
    return %arg0, %c0_i32, %arg1 : i32, i32, i32
  }
}

</mosaic_0001>

<llo_original>
// kernel: tpu_custom_call.1
$region0: #{tpu_custom_call.1}
  #allocation0 [shape = 'u32[]', space=smem, size = 0x4, offset = 0x4, fixed_abs, tag = 'smem constant byte address 0x4 - core index']
  #allocation1 [shape = 'u32[144,128]{1,0:T(1,128)}', space=vmem, size = 0x12000, scoped, tag = 'internal scratch']
  %s0 = inlined_call_operand.hbm [shape: f32[2,4,512], index: 0, kind: input, shape index: {}]
  %s1 = inlined_call_operand.vmem [shape: f32[1,4,1], index: 1, kind: input, shape index: {}]
  %s2 = inlined_call_operand.hbm [shape: f32[2,4,512], index: 2, kind: output, shape index: {}]
  %s3 = sld [smem:[#allocation0]]
  $region45: #{tpu_custom_call.1} parent=0
    _
  %s5 = ssub.s32 1, %s3
  %s6 = scalar_select 0, %s5, %s3
  $region1: #{tpu_custom_call.1} parent=0
    #allocation2 [shape = 'u8[8192]{0}', space=vmem, size = 0x2000, scoped, tag = 'input window, operand 0']
    #allocation3 [shape = 's32[2]{0}', space=sflag, size = 0x8, scoped, tag = 'scoped memory for tpu_custom_call.1']
    #allocation4 [shape = 's32[2]{0}', space=sflag, size = 0x8, scoped, tag = 'scoped memory for tpu_custom_call.1']
    #allocation5 [shape = 'u8[8192]{0}', space=vmem, size = 0x2000, scoped, tag = 'output window, operand 0']
    %7 = vsyncpa [#allocation3], 0
    %s8 = scalar_lea.sflag [#allocation3], 1
    %9 = vsyncpa %s8, 0
    %10 = vsyncpa [#allocation4], 0
    %s11 = scalar_lea.sflag [#allocation4], 1
    %12 = vsyncpa %s11, 0
    loop: start=0, step=1, limit=6
    $region2: #{tpu_custom_call.1} parent=1 // loop_pre_header
      _
    $region3: #{tpu_custom_call.1} parent=1 // loop_header
      %s14 = sphi 0, %s18
      %p15 = scmp.ge.s32.totalorder %s14, 6
      %s21 = sphi 0, %s33
      %s22 = sphi 0, %s29
      %s23 = sphi 0, %s21
      %s24 = sphi 0, %s22
      %s25 = sphi 0, %s23
      %s26 = sphi 0, %s24
      %s38 = sphi 0, %s40
      %s41 = sphi 0, %s38
      %s42 = sphi 0, %s41
      %s58 = sphi 0, %s42
      %s62 = sphi 0, %s62
      %s64 = sphi 0, %s62
      %s65 = sphi 0, %s64
      %s79 = sphi 0, %s65
      %s87 = sphi 0, %s89
      %s90 = sphi 0, %s87
      %s91 = sphi 0, %s90
      %s107 = sphi 0, %s91
    $region4: #{tpu_custom_call.1} parent=1 // loop_header_branch
      %17 = sbr.rel (%p15) target = $region8
    $region5: #{tpu_custom_call.1} parent=1 // loop_body
      %s19 = ssub.s32 %s14, 1
      %s20 = ssub.s32 %s14, 2
      %s27 = sadd.s32 1, %s22
      %p28 = scmp.ge.s32.totalorder %s27, 2
      %s29 = scalar_select %p28, 0, %s27
      %s30 = sadd.s32 1, %s21
      %s31 = scalar_select %p28, %s30, %s21
      %p32 = scmp.ge.s32.totalorder %s31, 2
      %s33 = scalar_select %p32, 0, %s31
      %s34 = ssub.s32 %s21, %s33
      %s35 = ssub.s32 %s22, %s29
      %s36 = sor.u32 %s34, %s35
      %p37 = scmp.eq.s32.totalorder %s36, 0
      %s39 = sadd.s32 %s38, 1
      %s40 = scalar_select %p37, %s38, %s39
      %p43 = pneg %p37
      %p44 = scmp.eq.s32.totalorder %s14, 3
      %p45 = por %p43, %p44
      %p46 = scmp.ne.s32.totalorder %s38, %s41
      %p47 = scmp.eq.s32.totalorder %s14, 0
      %p48 = por %p46, %p47
      %p49 = scmp.ne.s32.totalorder %s38, %s41
      %p50 = scmp.eq.s32.totalorder %s19, 3
      %p51 = por %p49, %p50
      %p52 = scmp.ne.s32.totalorder %s41, %s42
      %p53 = scmp.eq.s32.totalorder %s19, 0
      %p54 = por %p52, %p53
      %p55 = scmp.ne.s32.totalorder %s41, %s42
      %p56 = scmp.eq.s32.totalorder %s20, 3
      %p57 = por %p55, %p56
      %p59 = scmp.ne.s32.totalorder %s42, %s58
      %p60 = scmp.eq.s32.totalorder %s20, 0
      %p61 = por %p59, %p60
      %s63 = sadd.s32 %s62, 1
      %p66 = scmp.eq.s32.totalorder %s14, 3
      %p67 = scmp.ne.s32.totalorder %s62, %s64
      %p68 = scmp.eq.s32.totalorder %s14, 0
      %p69 = por %p67, %p68
      %p70 = scmp.ne.s32.totalorder %s62, %s64
      %p71 = scmp.eq.s32.totalorder %s19, 3
      %p72 = por %p70, %p71
      %p73 = scmp.ne.s32.totalorder %s64, %s65
      %p74 = scmp.eq.s32.totalorder %s19, 0
      %p75 = por %p73, %p74
      %p76 = scmp.ne.s32.totalorder %s64, %s65
      %p77 = scmp.eq.s32.totalorder %s20, 3
      %p78 = por %p76, %p77
      %p80 = scmp.ne.s32.totalorder %s65, %s79
      %p81 = scmp.eq.s32.totalorder %s20, 0
      %p82 = por %p80, %p81
      %s83 = ssub.s32 %s21, %s33
      %s84 = ssub.s32 %s22, %s29
      %s85 = sor.u32 %s83, %s84
      %p86 = scmp.eq.s32.totalorder %s85, 0
      %s88 = sadd.s32 %s87, 1
      %s89 = scalar_select %p86, %s87, %s88
      %p92 = pneg %p86
      %p93 = scmp.eq.s32.totalorder %s14, 3
      %p94 = por %p92, %p93
      %p95 = scmp.ne.s32.totalorder %s87, %s90
      %p96 = scmp.eq.s32.totalorder %s14, 0
      %p97 = por %p95, %p96
      %p98 = scmp.ne.s32.totalorder %s87, %s90
      %p99 = scmp.eq.s32.totalorder %s19, 3
      %p100 = por %p98, %p99
      %p101 = scmp.ne.s32.totalorder %s90, %s91
      %p102 = scmp.eq.s32.totalorder %s19, 0
      %p103 = por %p101, %p102
      %p104 = scmp.ne.s32.totalorder %s90, %s91
      %p105 = scmp.eq.s32.totalorder %s20, 3
      %p106 = por %p104, %p105
      %p108 = scmp.ne.s32.totalorder %s91, %s107
      %p109 = scmp.eq.s32.totalorder %s20, 0
      %p110 = por %p108, %p109
      %p111 = scmp.le.s32.totalorder 1, %s14
      %p112 = scmp.lt.s32.totalorder %s14, 5
      %p113 = pnand %p111, %p112
      %p114 = pneg %p113
      // Predicated region
      $region9: #{tpu_custom_call.1} parent=5 // pred_check
        _
      $region10: #{tpu_custom_call.1} parent=5 // pred_check_branch
        %116 = sbr.rel (%p113) target = $region12
      $region11: #{tpu_custom_call.1} parent=5 // pred_region
        %s117 = ssub.s32 %s14, 1
        // Predicated region
        $region13: #{tpu_custom_call.1} parent=11 // pred_check
          %p118 = pneg %p75
        $region14: #{tpu_custom_call.1} parent=11 // pred_check_branch
          %120 = sbr.rel (%p118) target = $region16
        $region15: #{tpu_custom_call.1} parent=11 // pred_region
          _
        $region16: #{tpu_custom_call.1} parent=11 // pred_fallthru
          _
      $region12: #{tpu_custom_call.1} parent=5 // pred_fallthru
        _
      %p121 = scmp.lt.s32.totalorder %s14, 4
      // Predicated region
      $region17: #{tpu_custom_call.1} parent=5 // pred_check
        %p122 = pneg %p121
      $region18: #{tpu_custom_call.1} parent=5 // pred_check_branch
        %124 = sbr.rel (%p122) target = $region20
      $region19: #{tpu_custom_call.1} parent=5 // pred_region
        // Predicated region
        $region21: #{tpu_custom_call.1} parent=19 // pred_check
          %p125 = pneg %p48
        $region22: #{tpu_custom_call.1} parent=19 // pred_check_branch
          %127 = sbr.rel (%p125) target = $region24
        $region23: #{tpu_custom_call.1} parent=19 // pred_region
          %s128 = sand.u32 %s38, 1
          %s129 = scalar_lea.sflag [#allocation3], %s128
          %s130 = sand.u32 %s38, 1
          %s131 = smul.addr %s130, 8
          %s132 = scalar_lea.vmem [#allocation2], %s131
          %s133 = smul.u32 2, %s22
          %s135 = ssub.s32 128, 128
          %136 = vsyncadd %s129, %s135
          %s137 = smul.addr %s21, 4
          %s138 = sadd.s32 %s133, %s137
          %s139 = smul.addr %s138, 64
          %s140 = scalar_lea.hbm %s0, %s139
          %s142 = sshll.u32 %s132, 4
          %s143 = int_to_ptr.vmem [resolvable:$true] %s142
          %145 = dma.hbm_to_vmem [thread:$0]  %s140, 128, %s143, %s129
        $region24: #{tpu_custom_call.1} parent=19 // pred_fallthru
          _
      $region20: #{tpu_custom_call.1} parent=5 // pred_fallthru
        _
      %p146 = scmp.le.s32.totalorder 1, %s14
      %p147 = scmp.lt.s32.totalorder %s14, 5
      %p148 = pnand %p146, %p147
      %p149 = pneg %p148
      // Predicated region
      $region25: #{tpu_custom_call.1} parent=5 // pred_check
        _
      $region26: #{tpu_custom_call.1} parent=5 // pred_check_branch
        %151 = sbr.rel (%p148) target = $region28
      $region27: #{tpu_custom_call.1} parent=5 // pred_region
        %s152 = ssub.s32 %s14, 1
        %s153 = sand.u32 %s41, 1
        %s154 = scalar_lea.sflag [#allocation3], %s153
        %s155 = sand.u32 %s41, 1
        %s156 = smul.addr %s155, 8
        %s157 = scalar_lea.vmem [#allocation2], %s156
        // Predicated region
        $region29: #{tpu_custom_call.1} parent=27 // pred_check
          %p158 = pneg %p54
        $region30: #{tpu_custom_call.1} parent=27 // pred_check_branch
          %160 = sbr.rel (%p158) target = $region32
        $region31: #{tpu_custom_call.1} parent=27 // pred_region
          %161 = dma.done %s154, 128
        $region32: #{tpu_custom_call.1} parent=27 // pred_fallthru
          _
        %s162 = sand.u32 %s41, 1
        %s163 = scalar_lea.sflag [#allocation3], %s162
        %s164 = sand.u32 %s41, 1
        %s165 = smul.addr %s164, 8
        %s166 = scalar_lea.vmem [#allocation2], %s165
        %p167 = pneg %p54
        %p168 = pneg %p51
        %p169 = pneg %p75
        %p170 = pneg %p72
        %p171 = pneg %p103
        %p172 = pneg %p100
        %s173 = sand.u32 %s90, 1
        %s174 = scalar_lea.sflag [#allocation4], %s173
        %s175 = sand.u32 %s90, 1
        %s176 = smul.addr %s175, 8
        %s177 = scalar_lea.vmem [#allocation5], %s176
        %s178 = smul.u32 2, %s24
        %s179 = smul.u32 2, %s24
        %v180 = vld [vmem:[%s157] sm:$0xff]
        %v182 = vcombine.high %v180, %v180
        %vm184 = vcmask 1043456
        %v185 = vsel %vm184, %v180, 0.0
        %v186 = vrot.slane %v185, 4
        %v187 = vadd.f32 %v185, %v186
        %v188 = vrot.slane %v187, 2
        %v189 = vadd.f32 %v187, %v188
        %v190 = vrot.slane %v189, 1
        %v191 = vadd.f32 %v189, %v190
        %v192 = vsel %vm184, %v182, 0.0
        %v193 = vrot.slane %v192, 4
        %v194 = vadd.f32 %v192, %v193
        %v195 = vrot.slane %v194, 2
        %v196 = vadd.f32 %v194, %v195
        %v197 = vrot.slane %v196, 1
        %v198 = vadd.f32 %v196, %v197
        %v199 = vmul.f32 %v180, %v180
        %v201 = vcombine.high %v199, %v199
        %v203 = vsel %vm184, %v199, 0.0
        %v204 = vrot.slane %v203, 4
        %v205 = vadd.f32 %v203, %v204
        %v206 = vrot.slane %v205, 2
        %v207 = vadd.f32 %v205, %v206
        %v208 = vrot.slane %v207, 1
        %v209 = vadd.f32 %v207, %v208
        %v210 = vsel %vm184, %v201, 0.0
        %v211 = vrot.slane %v210, 4
        %v212 = vadd.f32 %v210, %v211
        %v213 = vrot.slane %v212, 2
        %v214 = vadd.f32 %v212, %v213
        %v215 = vrot.slane %v214, 1
        %v216 = vadd.f32 %v214, %v215
        %v217 = vmul.f32 %v191, 0.25
        %v218 = vmul.f32 %v198, 0.25
        %v219 = vmul.f32 %v209, 0.25
        %v220 = vmul.f32 %v216, 0.25
        %v221 = vmul.f32 %v217, %v217
        %v222 = vmul.f32 %v218, %v218
        %v223 = vsub.f32 %v219, %v221
        %v224 = vsub.f32 %v220, %v222
        %v225 = vmax.f32 %v223, 0.0
        %v226 = vmax.f32 %v224, 0.0
        %v227 = vadd.f32 %v225, 1e-05
        %v228 = vadd.f32 %v226, 1e-05
        %v229 = vrsqrt.pop %v227
        %v230 = vrsqrt.pop %v228
        %v233 = vcombine.low %v217, %v218
        %v235 = vsub.f32 %v180, %v233
        %v236 = vld [vmem:[%s1] sm:$0xf]
        %238 = vset.pattern.permute.xlu0 0
        %239 = vperm.xlu0 %238, %v236
        %v240 = vpop.permute.xlu0 %239
        %v242 = vmul.f32 %v229, %v240
        %v243 = vmul.f32 %v230, %v240
        %v246 = vcombine.low %v242, %v243
        %v248 = vmul.f32 %v235, %v246
        %249 = vst [vmem:[%s177] sm:$0xff] %v248
        %s250 = sand.u32 %s90, 1
        %s251 = scalar_lea.sflag [#allocation4], %s250
        %s252 = sand.u32 %s90, 1
        %s253 = smul.addr %s252, 8
        %s254 = scalar_lea.vmem [#allocation5], %s253
        // Predicated region
        $region33: #{tpu_custom_call.1} parent=27 // pred_check
          %p255 = pneg %p100
        $region34: #{tpu_custom_call.1} parent=27 // pred_check_branch
          %257 = sbr.rel (%p255) target = $region36
        $region35: #{tpu_custom_call.1} parent=27 // pred_region
          %s258 = smul.u32 2, %s24
          %s260 = ssub.s32 128, 128
          %261 = vsyncadd %s251, %s260
          %s262 = smul.addr %s23, 4
          %s263 = sadd.s32 %s258, %s262
          %s264 = smul.addr %s263, 64
          %s265 = scalar_lea.hbm %s2, %s264
          %s267 = sshll.u32 %s254, 4
          %s268 = int_to_ptr.vmem [resolvable:$true] %s267
          %270 = dma.vmem_to_hbm [thread:$0]  %s268, 128, %s265, %s251
        $region36: #{tpu_custom_call.1} parent=27 // pred_fallthru
          _
      $region28: #{tpu_custom_call.1} parent=5 // pred_fallthru
        _
      %p271 = scmp.le.s32.totalorder 2, %s14
      // Predicated region
      $region37: #{tpu_custom_call.1} parent=5 // pred_check
        %p272 = pneg %p271
      $region38: #{tpu_custom_call.1} parent=5 // pred_check_branch
        %274 = sbr.rel (%p272) target = $region40
      $region39: #{tpu_custom_call.1} parent=5 // pred_region
        %s275 = ssub.s32 %s14, 2
        // Predicated region
        $region41: #{tpu_custom_call.1} parent=39 // pred_check
          %p276 = pneg %p106
        $region42: #{tpu_custom_call.1} parent=39 // pred_check_branch
          %278 = sbr.rel (%p276) target = $region44
        $region43: #{tpu_custom_call.1} parent=39 // pred_region
          %s279 = sand.u32 %s91, 1
          %s280 = scalar_lea.sflag [#allocation4], %s279
          %s281 = sand.u32 %s91, 1
          %s282 = smul.addr %s281, 8
          %s283 = scalar_lea.vmem [#allocation5], %s282
          %284 = dma.done %s280, 128
        $region44: #{tpu_custom_call.1} parent=39 // pred_fallthru
          _
      $region40: #{tpu_custom_call.1} parent=5 // pred_fallthru
        _
    $region6: #{tpu_custom_call.1} parent=1 // loop_footer
      %s18 = sadd.s32 1, %s14
    $region7: #{tpu_custom_call.1} parent=1 // loop_footer_branch
      %13 = sbr.rel target = $region3
    $region8: #{tpu_custom_call.1} parent=1 // loop_exit
      _
    %285 = vsyncpa [#allocation3], 1
    %s286 = scalar_lea.sflag [#allocation3], 1
    %287 = vsyncpa %s286, 1
    %288 = vsyncpa [#allocation4], 1
    %s289 = scalar_lea.sflag [#allocation4], 1
    %290 = vsyncpa %s289, 1

</llo_original>
